<compile_context>
chip_gen: v6e
topology: v6e:2x2x1
jax: 0.10.0
libtpu: 0.0.40
codegen_flags: <defaults>
</compile_context>

<pallas_src>
import functools

import jax
import jax.numpy as jnp
from jax.experimental import pallas as pl
from jax.experimental.pallas import tpu as pltpu


def _channel_mix(w, x, use_mxu):
    """(C, C) @ (C, T) channel mix on a lane-dense slab.

    For tiny C the MXU pads every operand to (8,128) tiles and wastes the
    systolic array (K = C), so we do C broadcasted VPU FMAs instead.
    """
    if use_mxu:
        return jnp.dot(w, x, preferred_element_type=jnp.float32)
    c_in = w.shape[1]
    acc = w[:, 0:1] * x[0:1, :]
    for c in range(1, c_in):
        acc = acc + w[:, c:c + 1] * x[c:c + 1, :]
    return acc


def _gated_fusion_kernel(x_ref, y_ref,
                         w1_ref, t1_ref,
                         w2_ref, t2_ref,
                         w3_ref, t3_ref,
                         o_ref, *, use_mxu):
    x = x_ref[0].astype(jnp.float32)      # (C, T) lane-dense slab
    y = y_ref[0].astype(jnp.float32)

    # z1 = ReLU(BN(Conv1x1(x)))  -- BN scale folded into w1, bias+BN shift in t1.
    z1 = jnp.maximum(_channel_mix(w1_ref[...], x, use_mxu) + t1_ref[...], 0.0)
    # z2 = ReLU(BN(Conv1x1(y)))
    z2 = jnp.maximum(_channel_mix(w2_ref[...], y, use_mxu) + t2_ref[...], 0.0)

    # gate: r = z1*z + z2*(1-z) == z2 + z*(z1-z2); z1+z2 >= 0 so exp never overflows.
    s = z1 + z2
    sig = pl.reciprocal(1.0 + jnp.exp(-s))        # exp + reciprocal run on the EUP
    r = z2 + sig * (z1 - z2)

    # two shared Conv1x1+BN+ReLU layers (same weights, applied twice)
    w3 = w3_ref[...]
    t3 = t3_ref[...]
    r = jnp.maximum(_channel_mix(w3, r, use_mxu) + t3, 0.0)
    r = jnp.maximum(_channel_mix(w3, r, use_mxu) + t3, 0.0)

    o_ref[0] = r.astype(o_ref.dtype)


def _fold_conv_bn(w, bias, gamma, beta, mean, var, eps=1e-5):
    """Fold conv bias + inference-mode BatchNorm into (scaled weight, per-channel shift)."""
    C = bias.shape[0]
    scale = gamma / jnp.sqrt(var + eps)                               # (C,) per out-channel
    w_folded = (w.reshape(C, C) * scale[:, None]).astype(jnp.float32)  # rows = out channels
    shift = (beta + (bias - mean) * scale).reshape(C, 1).astype(jnp.float32)
    return w_folded, shift


def _pick_tile_hw(HW, C, elt_bytes, n_batch):
    """Largest HW tile (multiple of 128, divisor of HW) that fits a VMEM budget."""
    budget = 24 << 20                                     # bytes for dbl-buffered x/y/out tiles
    target = budget // (6 * C * max(elt_bytes, 4))
    target = max(128, min(2048, (target // 128) * 128))
    if n_batch < 2:
        # keep >= 2 grid steps so both v7x TensorCores get work
        target = min(target, max(128, ((HW // 2) // 128) * 128))
    best = None
    for t in range(128, min(target, HW) + 1, 128):
        if HW % t == 0:
            best = t
    # ragged / small HW: fall back to a single full-row tile (block == full last dim)
    # TODO(synk): pad HW to a multiple of 128 with a masked final tile for large ragged inputs.
    return best if best is not None else HW


def gated_fusion(x_nchw, y_nchw, params, *, tile_hw=None):
    N, C, H, W = x_nchw.shape
    HW = H * W
    out_dtype = x_nchw.dtype

    # NCHW -> (N, C, H*W): pure metadata reshape, no HBM relayout pass.
    xm = x_nchw.reshape(N, C, HW)
    ym = y_nchw.reshape(N, C, HW)

    elt = jnp.dtype(xm.dtype).itemsize
    if tile_hw is None:
        tile_hw = _pick_tile_hw(HW, C, elt, N)
    assert HW % tile_hw == 0
    assert tile_hw == HW or tile_hw % 128 == 0

    w1, t1 = _fold_conv_bn(params["w1"], params["b1"], params["g1"],
                           params["be1"], params["m1"], params["v1"])
    w2, t2 = _fold_conv_bn(params["w2"], params["b2"], params["g2"],
                           params["be2"], params["m2"], params["v2"])
    w3, t3 = _fold_conv_bn(params["w3"], params["b3"], params["g3"],
                           params["be3"], params["m3"], params["v3"])

    grid = (N, HW // tile_hw)
    use_mxu = C > 16

    xy_spec = pl.BlockSpec((1, C, tile_hw), lambda n, t: (n, 0, t))
    w_spec = pl.BlockSpec((C, C), lambda n, t: (0, 0))
    s_spec = pl.BlockSpec((C, 1), lambda n, t: (0, 0))

    # VMEM budget: double-buffered x/y/out tiles + (padded) params + f32 temporaries.
    # Cap below v7x's 64 MiB physical VMEM; never below v5e's 16 MiB default scope.
    tile_bytes = C * tile_hw * elt
    pad_c = max(C, 8)
    param_bytes = 3 * 2 * (pad_c * max(C, 128) + pad_c * 128) * 4
    vmem_limit = 6 * tile_bytes + param_bytes + 6 * C * tile_hw * 4 + (4 << 20)
    vmem_limit = int(min(max(vmem_limit, 16 << 20), 48 << 20))

    out = pl.pallas_call(
        functools.partial(_gated_fusion_kernel, use_mxu=use_mxu),
        out_shape=jax.ShapeDtypeStruct((N, C, HW), out_dtype),
        grid_spec=pltpu.PrefetchScalarGridSpec(
            num_scalar_prefetch=0,
            grid=grid,
            in_specs=[xy_spec, xy_spec,
                      w_spec, s_spec,
                      w_spec, s_spec,
                      w_spec, s_spec],
            out_specs=xy_spec,
        ),
        compiler_params=pltpu.CompilerParams(
            dimension_semantics=("parallel", "parallel"),
            vmem_limit_bytes=vmem_limit),
    )(xm, ym, w1, t1, w2, t2, w3, t3)

    return out.reshape(N, C, H, W)


def _reference(x_nchw, y_nchw, params, eps=1e-5):
    """Pure-JAX reference replicating the PyTorch forward (eval-mode BN)."""
    N, C, H, W = x_nchw.shape

    def fc(t, w, b, g, be, m, v):
        tm = t.reshape(N, C, H * W).astype(jnp.float32)
        out = jnp.einsum("oi,nit->not", w.reshape(C, C), tm,
                         precision=jax.lax.Precision.HIGHEST) + b[None, :, None]
        scale = g / jnp.sqrt(v + eps)
        out = (out - m[None, :, None]) * scale[None, :, None] + be[None, :, None]
        return jnp.maximum(out, 0.0).reshape(N, C, H, W)

    z1 = fc(x_nchw, params["w1"], params["b1"], params["g1"],
            params["be1"], params["m1"], params["v1"])
    z2 = fc(y_nchw, params["w2"], params["b2"], params["g2"],
            params["be2"], params["m2"], params["v2"])
    z = jax.nn.sigmoid(z1 + z2)
    r = z1 * z + z2 * (1.0 - z)
    for _ in range(2):
        r = fc(r, params["w3"], params["b3"], params["g3"],
               params["be3"], params["m3"], params["v3"])
    return r


def _init_params(key, C):
    ks = jax.random.split(key, 6)
    bound = 1.0 / jnp.sqrt(C)  # PyTorch Conv2d default init range
    p = {}
    for idx, name in enumerate(("1", "2", "3")):
        p["w" + name] = jax.random.uniform(ks[2 * idx], (C, C, 1, 1),
                                           minval=-bound, maxval=bound, dtype=jnp.float32)
        p["b" + name] = jax.random.uniform(ks[2 * idx + 1], (C,),
                                           minval=-bound, maxval=bound, dtype=jnp.float32)
        # BatchNorm2d defaults (gamma=1, beta=0, running_mean=0, running_var=1)
        p["g" + name] = jnp.ones((C,), jnp.float32)
        p["be" + name] = jnp.zeros((C,), jnp.float32)
        p["m" + name] = jnp.zeros((C,), jnp.float32)
        p["v" + name] = jnp.ones((C,), jnp.float32)
    return p
    # TODO(synk): training-mode BatchNorm (batch statistics) not modeled; uses inference-mode running stats.


if __name__ == "__main__":
    key = jax.random.PRNGKey(0)
    kx, ky, kp = jax.random.split(key, 3)

    N, C, H, W = 2, 4, 16, 16
    x = jax.random.normal(kx, (N, C, H, W), dtype=jnp.float32)
    y = jax.random.normal(ky, (N, C, H, W), dtype=jnp.float32)
    params = _init_params(kp, C)

    out = jax.block_until_ready(gated_fusion(x, y, params))
    ref = _reference(x, y, params)

    assert out.shape == (N, C, H, W)
    max_err = float(jnp.max(jnp.abs(out - ref)))
    assert jnp.allclose(out, ref, atol=1e-4, rtol=1e-4), max_err

    print("KERNEL_OK")
</pallas_src>

<mosaic_0001>
module attributes {stable_mosaic.version = 11 : i64} {
  func.func @_gated_fusion_kernel(%arg0: i32, %arg1: i32, %arg2: memref<1x4x256xf32, #tpu.memory_space<vmem>>, %arg3: memref<1x4x256xf32, #tpu.memory_space<vmem>>, %arg4: memref<4x4xf32, #tpu.memory_space<vmem>>, %arg5: memref<4x1xf32, #tpu.memory_space<vmem>>, %arg6: memref<4x4xf32, #tpu.memory_space<vmem>>, %arg7: memref<4x1xf32, #tpu.memory_space<vmem>>, %arg8: memref<4x4xf32, #tpu.memory_space<vmem>>, %arg9: memref<4x1xf32, #tpu.memory_space<vmem>>, %arg10: memref<1x4x256xf32, #tpu.memory_space<vmem>>) attributes {dimension_semantics = [#tpu.dimension_semantics<parallel>, #tpu.dimension_semantics<parallel>], iteration_bounds = array<i64: 2, 1>, scalar_prefetch = 0 : i64, scratch_operands = 0 : i64, tpu.core_type = #tpu.core_type<tc>, window_params = [{transform_indices = @transform_0, window_bounds = array<i64: 1, 4, 256>}, {transform_indices = @transform_1, window_bounds = array<i64: 1, 4, 256>}, {pipeline_mode = #tpu.pipeline_mode<synchronous>, transform_indices = @transform_2, window_bounds = array<i64: 4, 4>}, {pipeline_mode = #tpu.pipeline_mode<synchronous>, transform_indices = @transform_3, window_bounds = array<i64: 4, 1>}, {pipeline_mode = #tpu.pipeline_mode<synchronous>, transform_indices = @transform_4, window_bounds = array<i64: 4, 4>}, {pipeline_mode = #tpu.pipeline_mode<synchronous>, transform_indices = @transform_5, window_bounds = array<i64: 4, 1>}, {pipeline_mode = #tpu.pipeline_mode<synchronous>, transform_indices = @transform_6, window_bounds = array<i64: 4, 4>}, {pipeline_mode = #tpu.pipeline_mode<synchronous>, transform_indices = @transform_7, window_bounds = array<i64: 4, 1>}, {transform_indices = @transform_8, window_bounds = array<i64: 1, 4, 256>}]} {
    %c0 = arith.constant 0 : index
    %c0_0 = arith.constant 0 : index
    %c0_1 = arith.constant 0 : index
    %0 = vector.load %arg2[%c0, %c0_0, %c0_1] : memref<1x4x256xf32, #tpu.memory_space<vmem>>, vector<1x4x256xf32>
    %1 = vector.shape_cast %0 : vector<1x4x256xf32> to vector<4x256xf32>
    %c0_2 = arith.constant 0 : index
    %c0_3 = arith.constant 0 : index
    %c0_4 = arith.constant 0 : index
    %2 = vector.load %arg3[%c0_2, %c0_3, %c0_4] : memref<1x4x256xf32, #tpu.memory_space<vmem>>, vector<1x4x256xf32>
    %3 = vector.shape_cast %2 : vector<1x4x256xf32> to vector<4x256xf32>
    %c0_5 = arith.constant 0 : index
    %c0_6 = arith.constant 0 : index
    %4 = vector.load %arg4[%c0_5, %c0_6] : memref<4x4xf32, #tpu.memory_space<vmem>>, vector<4x4xf32>
    %5 = vector.extract_strided_slice %4 {offsets = [0, 0], sizes = [4, 1], strides = [1, 1]} : vector<4x4xf32> to vector<4x1xf32>
    %6 = vector.extract_strided_slice %1 {offsets = [0, 0], sizes = [1, 256], strides = [1, 1]} : vector<4x256xf32> to vector<1x256xf32>
    %7 = vector.broadcast %5 : vector<4x1xf32> to vector<4x256xf32>
    %8 = vector.broadcast %6 : vector<1x256xf32> to vector<4x256xf32>
    %9 = arith.mulf %7, %8 : vector<4x256xf32>
    %10 = vector.extract_strided_slice %4 {offsets = [0, 1], sizes = [4, 1], strides = [1, 1]} : vector<4x4xf32> to vector<4x1xf32>
    %11 = vector.extract_strided_slice %1 {offsets = [1, 0], sizes = [1, 256], strides = [1, 1]} : vector<4x256xf32> to vector<1x256xf32>
    %12 = vector.broadcast %10 : vector<4x1xf32> to vector<4x256xf32>
    %13 = vector.broadcast %11 : vector<1x256xf32> to vector<4x256xf32>
    %14 = arith.mulf %12, %13 : vector<4x256xf32>
    %15 = arith.addf %9, %14 : vector<4x256xf32>
    %16 = vector.extract_strided_slice %4 {offsets = [0, 2], sizes = [4, 1], strides = [1, 1]} : vector<4x4xf32> to vector<4x1xf32>
    %17 = vector.extract_strided_slice %1 {offsets = [2, 0], sizes = [1, 256], strides = [1, 1]} : vector<4x256xf32> to vector<1x256xf32>
    %18 = vector.broadcast %16 : vector<4x1xf32> to vector<4x256xf32>
    %19 = vector.broadcast %17 : vector<1x256xf32> to vector<4x256xf32>
    %20 = arith.mulf %18, %19 : vector<4x256xf32>
    %21 = arith.addf %15, %20 : vector<4x256xf32>
    %22 = vector.extract_strided_slice %4 {offsets = [0, 3], sizes = [4, 1], strides = [1, 1]} : vector<4x4xf32> to vector<4x1xf32>
    %23 = vector.extract_strided_slice %1 {offsets = [3, 0], sizes = [1, 256], strides = [1, 1]} : vector<4x256xf32> to vector<1x256xf32>
    %24 = vector.broadcast %22 : vector<4x1xf32> to vector<4x256xf32>
    %25 = vector.broadcast %23 : vector<1x256xf32> to vector<4x256xf32>
    %26 = arith.mulf %24, %25 : vector<4x256xf32>
    %27 = arith.addf %21, %26 : vector<4x256xf32>
    %c0_7 = arith.constant 0 : index
    %c0_8 = arith.constant 0 : index
    %28 = vector.load %arg5[%c0_7, %c0_8] : memref<4x1xf32, #tpu.memory_space<vmem>>, vector<4x1xf32>
    %29 = vector.broadcast %28 : vector<4x1xf32> to vector<4x256xf32>
    %30 = arith.addf %27, %29 : vector<4x256xf32>
    %cst = arith.constant 0.000000e+00 : f32
    %31 = vector.broadcast %cst : f32 to vector<4x256xf32>
    %32 = arith.maximumf %30, %31 : vector<4x256xf32>
    %c0_9 = arith.constant 0 : index
    %c0_10 = arith.constant 0 : index
    %33 = vector.load %arg6[%c0_9, %c0_10] : memref<4x4xf32, #tpu.memory_space<vmem>>, vector<4x4xf32>
    %34 = vector.extract_strided_slice %33 {offsets = [0, 0], sizes = [4, 1], strides = [1, 1]} : vector<4x4xf32> to vector<4x1xf32>
    %35 = vector.extract_strided_slice %3 {offsets = [0, 0], sizes = [1, 256], strides = [1, 1]} : vector<4x256xf32> to vector<1x256xf32>
    %36 = vector.broadcast %34 : vector<4x1xf32> to vector<4x256xf32>
    %37 = vector.broadcast %35 : vector<1x256xf32> to vector<4x256xf32>
    %38 = arith.mulf %36, %37 : vector<4x256xf32>
    %39 = vector.extract_strided_slice %33 {offsets = [0, 1], sizes = [4, 1], strides = [1, 1]} : vector<4x4xf32> to vector<4x1xf32>
    %40 = vector.extract_strided_slice %3 {offsets = [1, 0], sizes = [1, 256], strides = [1, 1]} : vector<4x256xf32> to vector<1x256xf32>
    %41 = vector.broadcast %39 : vector<4x1xf32> to vector<4x256xf32>
    %42 = vector.broadcast %40 : vector<1x256xf32> to vector<4x256xf32>
    %43 = arith.mulf %41, %42 : vector<4x256xf32>
    %44 = arith.addf %38, %43 : vector<4x256xf32>
    %45 = vector.extract_strided_slice %33 {offsets = [0, 2], sizes = [4, 1], strides = [1, 1]} : vector<4x4xf32> to vector<4x1xf32>
    %46 = vector.extract_strided_slice %3 {offsets = [2, 0], sizes = [1, 256], strides = [1, 1]} : vector<4x256xf32> to vector<1x256xf32>
    %47 = vector.broadcast %45 : vector<4x1xf32> to vector<4x256xf32>
    %48 = vector.broadcast %46 : vector<1x256xf32> to vector<4x256xf32>
    %49 = arith.mulf %47, %48 : vector<4x256xf32>
    %50 = arith.addf %44, %49 : vector<4x256xf32>
    %51 = vector.extract_strided_slice %33 {offsets = [0, 3], sizes = [4, 1], strides = [1, 1]} : vector<4x4xf32> to vector<4x1xf32>
    %52 = vector.extract_strided_slice %3 {offsets = [3, 0], sizes = [1, 256], strides = [1, 1]} : vector<4x256xf32> to vector<1x256xf32>
    %53 = vector.broadcast %51 : vector<4x1xf32> to vector<4x256xf32>
    %54 = vector.broadcast %52 : vector<1x256xf32> to vector<4x256xf32>
    %55 = arith.mulf %53, %54 : vector<4x256xf32>
    %56 = arith.addf %50, %55 : vector<4x256xf32>
    %c0_11 = arith.constant 0 : index
    %c0_12 = arith.constant 0 : index
    %57 = vector.load %arg7[%c0_11, %c0_12] : memref<4x1xf32, #tpu.memory_space<vmem>>, vector<4x1xf32>
    %58 = vector.broadcast %57 : vector<4x1xf32> to vector<4x256xf32>
    %59 = arith.addf %56, %58 : vector<4x256xf32>
    %cst_13 = arith.constant 0.000000e+00 : f32
    %60 = vector.broadcast %cst_13 : f32 to vector<4x256xf32>
    %61 = arith.maximumf %59, %60 : vector<4x256xf32>
    %62 = arith.addf %32, %61 : vector<4x256xf32>
    %cst_14 = arith.constant 0.000000e+00 : f32
    %63 = vector.broadcast %cst_14 : f32 to vector<4x256xf32>
    %64 = arith.subf %63, %62 : vector<4x256xf32>
    %65 = math.exp %64 : vector<4x256xf32>
    %cst_15 = arith.constant 1.000000e+00 : f32
    %66 = vector.broadcast %cst_15 : f32 to vector<4x256xf32>
    %67 = arith.addf %66, %65 : vector<4x256xf32>
    %68 = tpu.reciprocal %67 : vector<4x256xf32> -> vector<4x256xf32>
    %69 = arith.subf %32, %61 : vector<4x256xf32>
    %70 = arith.mulf %68, %69 : vector<4x256xf32>
    %71 = arith.addf %61, %70 : vector<4x256xf32>
    %c0_16 = arith.constant 0 : index
    %c0_17 = arith.constant 0 : index
    %72 = vector.load %arg8[%c0_16, %c0_17] : memref<4x4xf32, #tpu.memory_space<vmem>>, vector<4x4xf32>
    %c0_18 = arith.constant 0 : index
    %c0_19 = arith.constant 0 : index
    %73 = vector.load %arg9[%c0_18, %c0_19] : memref<4x1xf32, #tpu.memory_space<vmem>>, vector<4x1xf32>
    %74 = vector.extract_strided_slice %72 {offsets = [0, 0], sizes = [4, 1], strides = [1, 1]} : vector<4x4xf32> to vector<4x1xf32>
    %75 = vector.extract_strided_slice %71 {offsets = [0, 0], sizes = [1, 256], strides = [1, 1]} : vector<4x256xf32> to vector<1x256xf32>
    %76 = vector.broadcast %74 : vector<4x1xf32> to vector<4x256xf32>
    %77 = vector.broadcast %75 : vector<1x256xf32> to vector<4x256xf32>
    %78 = arith.mulf %76, %77 : vector<4x256xf32>
    %79 = vector.extract_strided_slice %72 {offsets = [0, 1], sizes = [4, 1], strides = [1, 1]} : vector<4x4xf32> to vector<4x1xf32>
    %80 = vector.extract_strided_slice %71 {offsets = [1, 0], sizes = [1, 256], strides = [1, 1]} : vector<4x256xf32> to vector<1x256xf32>
    %81 = vector.broadcast %79 : vector<4x1xf32> to vector<4x256xf32>
    %82 = vector.broadcast %80 : vector<1x256xf32> to vector<4x256xf32>
    %83 = arith.mulf %81, %82 : vector<4x256xf32>
    %84 = arith.addf %78, %83 : vector<4x256xf32>
    %85 = vector.extract_strided_slice %72 {offsets = [0, 2], sizes = [4, 1], strides = [1, 1]} : vector<4x4xf32> to vector<4x1xf32>
    %86 = vector.extract_strided_slice %71 {offsets = [2, 0], sizes = [1, 256], strides = [1, 1]} : vector<4x256xf32> to vector<1x256xf32>
    %87 = vector.broadcast %85 : vector<4x1xf32> to vector<4x256xf32>
    %88 = vector.broadcast %86 : vector<1x256xf32> to vector<4x256xf32>
    %89 = arith.mulf %87, %88 : vector<4x256xf32>
    %90 = arith.addf %84, %89 : vector<4x256xf32>
    %91 = vector.extract_strided_slice %72 {offsets = [0, 3], sizes = [4, 1], strides = [1, 1]} : vector<4x4xf32> to vector<4x1xf32>
    %92 = vector.extract_strided_slice %71 {offsets = [3, 0], sizes = [1, 256], strides = [1, 1]} : vector<4x256xf32> to vector<1x256xf32>
    %93 = vector.broadcast %91 : vector<4x1xf32> to vector<4x256xf32>
    %94 = vector.broadcast %92 : vector<1x256xf32> to vector<4x256xf32>
    %95 = arith.mulf %93, %94 : vector<4x256xf32>
    %96 = arith.addf %90, %95 : vector<4x256xf32>
    %97 = vector.broadcast %73 : vector<4x1xf32> to vector<4x256xf32>
    %98 = arith.addf %96, %97 : vector<4x256xf32>
    %cst_20 = arith.constant 0.000000e+00 : f32
    %99 = vector.broadcast %cst_20 : f32 to vector<4x256xf32>
    %100 = arith.maximumf %98, %99 : vector<4x256xf32>
    %101 = vector.extract_strided_slice %72 {offsets = [0, 0], sizes = [4, 1], strides = [1, 1]} : vector<4x4xf32> to vector<4x1xf32>
    %102 = vector.extract_strided_slice %100 {offsets = [0, 0], sizes = [1, 256], strides = [1, 1]} : vector<4x256xf32> to vector<1x256xf32>
    %103 = vector.broadcast %101 : vector<4x1xf32> to vector<4x256xf32>
    %104 = vector.broadcast %102 : vector<1x256xf32> to vector<4x256xf32>
    %105 = arith.mulf %103, %104 : vector<4x256xf32>
    %106 = vector.extract_strided_slice %72 {offsets = [0, 1], sizes = [4, 1], strides = [1, 1]} : vector<4x4xf32> to vector<4x1xf32>
    %107 = vector.extract_strided_slice %100 {offsets = [1, 0], sizes = [1, 256], strides = [1, 1]} : vector<4x256xf32> to vector<1x256xf32>
    %108 = vector.broadcast %106 : vector<4x1xf32> to vector<4x256xf32>
    %109 = vector.broadcast %107 : vector<1x256xf32> to vector<4x256xf32>
    %110 = arith.mulf %108, %109 : vector<4x256xf32>
    %111 = arith.addf %105, %110 : vector<4x256xf32>
    %112 = vector.extract_strided_slice %72 {offsets = [0, 2], sizes = [4, 1], strides = [1, 1]} : vector<4x4xf32> to vector<4x1xf32>
    %113 = vector.extract_strided_slice %100 {offsets = [2, 0], sizes = [1, 256], strides = [1, 1]} : vector<4x256xf32> to vector<1x256xf32>
    %114 = vector.broadcast %112 : vector<4x1xf32> to vector<4x256xf32>
    %115 = vector.broadcast %113 : vector<1x256xf32> to vector<4x256xf32>
    %116 = arith.mulf %114, %115 : vector<4x256xf32>
    %117 = arith.addf %111, %116 : vector<4x256xf32>
    %118 = vector.extract_strided_slice %72 {offsets = [0, 3], sizes = [4, 1], strides = [1, 1]} : vector<4x4xf32> to vector<4x1xf32>
    %119 = vector.extract_strided_slice %100 {offsets = [3, 0], sizes = [1, 256], strides = [1, 1]} : vector<4x256xf32> to vector<1x256xf32>
    %120 = vector.broadcast %118 : vector<4x1xf32> to vector<4x256xf32>
    %121 = vector.broadcast %119 : vector<1x256xf32> to vector<4x256xf32>
    %122 = arith.mulf %120, %121 : vector<4x256xf32>
    %123 = arith.addf %117, %122 : vector<4x256xf32>
    %124 = vector.broadcast %73 : vector<4x1xf32> to vector<4x256xf32>
    %125 = arith.addf %123, %124 : vector<4x256xf32>
    %cst_21 = arith.constant 0.000000e+00 : f32
    %126 = vector.broadcast %cst_21 : f32 to vector<4x256xf32>
    %127 = arith.maximumf %125, %126 : vector<4x256xf32>
    %c0_22 = arith.constant 0 : index
    %c0_23 = arith.constant 0 : index
    %c0_24 = arith.constant 0 : index
    %128 = vector.load %arg10[%c0_22, %c0_23, %c0_24] : memref<1x4x256xf32, #tpu.memory_space<vmem>>, vector<1x4x256xf32>
    %129 = vector.shape_cast %128 : vector<1x4x256xf32> to vector<4x256xf32>
    %130 = vector.shape_cast %127 : vector<4x256xf32> to vector<1x4x256xf32>
    tpu.vector_store %arg10[%c0_22, %c0_23, %c0_24], %130 {strides = array<i32>} : memref<1x4x256xf32, #tpu.memory_space<vmem>>, vector<1x4x256xf32>,
    return
  }
  func.func @transform_0(%arg0: i32, %arg1: i32) -> (i32, i32, i32) {
    %c0_i32 = arith.constant 0 : i32
    %c0_i32_0 = arith.constant 0 : i32
    return %arg0, %c0_i32, %arg1 : i32, i32, i32
  }
  func.func @transform_1(%arg0: i32, %arg1: i32) -> (i32, i32, i32) {
    %c0_i32 = arith.constant 0 : i32
    %c0_i32_0 = arith.constant 0 : i32
    return %arg0, %c0_i32, %arg1 : i32, i32, i32
  }
  func.func @transform_2(%arg0: i32, %arg1: i32) -> (i32, i32) {
    %c0_i32 = arith.constant 0 : i32
    %c0_i32_0 = arith.constant 0 : i32
    %c0_i32_1 = arith.constant 0 : i32
    return %c0_i32, %c0_i32_0 : i32, i32
  }
  func.func @transform_3(%arg0: i32, %arg1: i32) -> (i32, i32) {
    %c0_i32 = arith.constant 0 : i32
    %c0_i32_0 = arith.constant 0 : i32
    %c0_i32_1 = arith.constant 0 : i32
    return %c0_i32, %c0_i32_0 : i32, i32
  }
  func.func @transform_4(%arg0: i32, %arg1: i32) -> (i32, i32) {
    %c0_i32 = arith.constant 0 : i32
    %c0_i32_0 = arith.constant 0 : i32
    %c0_i32_1 = arith.constant 0 : i32
    return %c0_i32, %c0_i32_0 : i32, i32
  }
  func.func @transform_5(%arg0: i32, %arg1: i32) -> (i32, i32) {
    %c0_i32 = arith.constant 0 : i32
    %c0_i32_0 = arith.constant 0 : i32
    %c0_i32_1 = arith.constant 0 : i32
    return %c0_i32, %c0_i32_0 : i32, i32
  }
  func.func @transform_6(%arg0: i32, %arg1: i32) -> (i32, i32) {
    %c0_i32 = arith.constant 0 : i32
    %c0_i32_0 = arith.constant 0 : i32
    %c0_i32_1 = arith.constant 0 : i32
    return %c0_i32, %c0_i32_0 : i32, i32
  }
  func.func @transform_7(%arg0: i32, %arg1: i32) -> (i32, i32) {
    %c0_i32 = arith.constant 0 : i32
    %c0_i32_0 = arith.constant 0 : i32
    %c0_i32_1 = arith.constant 0 : i32
    return %c0_i32, %c0_i32_0 : i32, i32
  }
  func.func @transform_8(%arg0: i32, %arg1: i32) -> (i32, i32, i32) {
    %c0_i32 = arith.constant 0 : i32
    %c0_i32_0 = arith.constant 0 : i32
    return %arg0, %c0_i32, %arg1 : i32, i32, i32
  }
}

</mosaic_0001>

<llo_original>
// kernel: tpu_custom_call.1
$region0: #{tpu_custom_call.1}
  #allocation0 [shape = 'u32[]', space=smem, size = 0x4, offset = 0x4, fixed_abs, tag = 'smem constant byte address 0x4 - core index']
  #allocation1 [shape = 'u32[144,128]{1,0:T(1,128)}', space=vmem, size = 0x12000, scoped, tag = 'internal scratch']
  %s0 = inlined_call_operand.hbm [shape: f32[2,4,256], index: 0, kind: input, shape index: {}]
  %s1 = inlined_call_operand.vmem [shape: f32[2,4,256], index: 1, kind: input, shape index: {}]
  %s2 = inlined_call_operand.hbm [shape: f32[4,4], index: 2, kind: input, shape index: {}]
  %s3 = inlined_call_operand.vmem [shape: f32[4,1], index: 3, kind: input, shape index: {}]
  %s4 = inlined_call_operand.vmem [shape: f32[4,4], index: 4, kind: input, shape index: {}]
  %s5 = inlined_call_operand.vmem [shape: f32[4,1], index: 5, kind: input, shape index: {}]
  %s6 = inlined_call_operand.vmem [shape: f32[4,4], index: 6, kind: input, shape index: {}]
  %s7 = inlined_call_operand.vmem [shape: f32[4,1], index: 7, kind: input, shape index: {}]
  %s8 = inlined_call_operand.hbm [shape: f32[2,4,256], index: 8, kind: output, shape index: {}]
  %s9 = sld [smem:[#allocation0]]
  $region73: #{tpu_custom_call.1} parent=0
    _
  %s11 = ssub.s32 1, %s9
  %s12 = scalar_select 0, %s11, %s9
  $region1: #{tpu_custom_call.1} parent=0
    #allocation2 [shape = 'u8[8192]{0}', space=vmem, size = 0x2000, scoped, tag = 'input window, operand 0']
    #allocation3 [shape = 's32[2]{0}', space=sflag, size = 0x8, scoped, tag = 'scoped memory for tpu_custom_call.1']
    #allocation4 [shape = 's32[2]{0}', space=sflag, size = 0x8, scoped, tag = 'scoped memory for tpu_custom_call.1']
    #allocation5 [shape = 'u8[2048]{0}', space=vmem, size = 0x800, scoped, tag = 'input window, operand 2, single buffered']
    #allocation6 [shape = 's32[1]{0}', space=sflag, size = 0x4, scoped, tag = 'scoped memory for tpu_custom_call.1']
    #allocation7 [shape = 'u8[8192]{0}', space=vmem, size = 0x2000, scoped, tag = 'output window, operand 0']
    %13 = vsyncpa [#allocation3], 0
    %s14 = scalar_lea.sflag [#allocation3], 1
    %15 = vsyncpa %s14, 0
    %16 = vsyncpa [#allocation6], 0
    %17 = vsyncpa [#allocation4], 0
    %s18 = scalar_lea.sflag [#allocation4], 1
    %19 = vsyncpa %s18, 0
    loop: start=0, step=1, limit=4
    $region2: #{tpu_custom_call.1} parent=1 // loop_pre_header
      _
    $region3: #{tpu_custom_call.1} parent=1 // loop_header
      %s21 = sphi 0, %s25
      %p22 = scmp.ge.s32.totalorder %s21, 4
      %s28 = sphi 0, %s40
      %s29 = sphi 0, %s36
      %s30 = sphi 0, %s28
      %s31 = sphi 0, %s29
      %s32 = sphi 0, %s30
      %s33 = sphi 0, %s31
      %s45 = sphi 0, %s47
      %s48 = sphi 0, %s45
      %s49 = sphi 0, %s48
      %s65 = sphi 0, %s49
      %s73 = sphi 0, %s75
      %s76 = sphi 0, %s73
      %s77 = sphi 0, %s76
      %s93 = sphi 0, %s77
      %s97 = sphi 0, %s97
      %s99 = sphi 0, %s97
      %s100 = sphi 0, %s99
      %s114 = sphi 0, %s100
      %s118 = sphi 0, %s118
      %s120 = sphi 0, %s118
      %s121 = sphi 0, %s120
      %s135 = sphi 0, %s121
      %s139 = sphi 0, %s139
      %s141 = sphi 0, %s139
      %s142 = sphi 0, %s141
      %s156 = sphi 0, %s142
      %s160 = sphi 0, %s160
      %s162 = sphi 0, %s160
      %s163 = sphi 0, %s162
      %s177 = sphi 0, %s163
      %s181 = sphi 0, %s181
      %s183 = sphi 0, %s181
      %s184 = sphi 0, %s183
      %s198 = sphi 0, %s184
      %s202 = sphi 0, %s202
      %s204 = sphi 0, %s202
      %s205 = sphi 0, %s204
      %s219 = sphi 0, %s205
      %s227 = sphi 0, %s229
      %s230 = sphi 0, %s227
      %s231 = sphi 0, %s230
      %s247 = sphi 0, %s231
    $region4: #{tpu_custom_call.1} parent=1 // loop_header_branch
      %24 = sbr.rel (%p22) target = $region8
    $region5: #{tpu_custom_call.1} parent=1 // loop_body
      %s26 = ssub.s32 %s21, 1
      %s27 = ssub.s32 %s21, 2
      %s34 = sadd.s32 1, %s29
      %p35 = scmp.ge.s32.totalorder %s34, 1
      %s36 = scalar_select %p35, 0, %s34
      %s37 = sadd.s32 1, %s28
      %s38 = scalar_select %p35, %s37, %s28
      %p39 = scmp.ge.s32.totalorder %s38, 2
      %s40 = scalar_select %p39, 0, %s38
      %s41 = ssub.s32 %s28, %s40
      %s42 = ssub.s32 %s29, %s36
      %s43 = sor.u32 %s41, %s42
      %p44 = scmp.eq.s32.totalorder %s43, 0
      %s46 = sadd.s32 %s45, 1
      %s47 = scalar_select %p44, %s45, %s46
      %p50 = pneg %p44
      %p51 = scmp.eq.s32.totalorder %s21, 1
      %p52 = por %p50, %p51
      %p53 = scmp.ne.s32.totalorder %s45, %s48
      %p54 = scmp.eq.s32.totalorder %s21, 0
      %p55 = por %p53, %p54
      %p56 = scmp.ne.s32.totalorder %s45, %s48
      %p57 = scmp.eq.s32.totalorder %s26, 1
      %p58 = por %p56, %p57
      %p59 = scmp.ne.s32.totalorder %s48, %s49
      %p60 = scmp.eq.s32.totalorder %s26, 0
      %p61 = por %p59, %p60
      %p62 = scmp.ne.s32.totalorder %s48, %s49
      %p63 = scmp.eq.s32.totalorder %s27, 1
      %p64 = por %p62, %p63
      %p66 = scmp.ne.s32.totalorder %s49, %s65
      %p67 = scmp.eq.s32.totalorder %s27, 0
      %p68 = por %p66, %p67
      %s69 = ssub.s32 %s28, %s40
      %s70 = ssub.s32 %s29, %s36
      %s71 = sor.u32 %s69, %s70
      %p72 = scmp.eq.s32.totalorder %s71, 0
      %s74 = sadd.s32 %s73, 1
      %s75 = scalar_select %p72, %s73, %s74
      %p78 = pneg %p72
      %p79 = scmp.eq.s32.totalorder %s21, 1
      %p80 = por %p78, %p79
      %p81 = scmp.ne.s32.totalorder %s73, %s76
      %p82 = scmp.eq.s32.totalorder %s21, 0
      %p83 = por %p81, %p82
      %p84 = scmp.ne.s32.totalorder %s73, %s76
      %p85 = scmp.eq.s32.totalorder %s26, 1
      %p86 = por %p84, %p85
      %p87 = scmp.ne.s32.totalorder %s76, %s77
      %p88 = scmp.eq.s32.totalorder %s26, 0
      %p89 = por %p87, %p88
      %p90 = scmp.ne.s32.totalorder %s76, %s77
      %p91 = scmp.eq.s32.totalorder %s27, 1
      %p92 = por %p90, %p91
      %p94 = scmp.ne.s32.totalorder %s77, %s93
      %p95 = scmp.eq.s32.totalorder %s27, 0
      %p96 = por %p94, %p95
      %s98 = sadd.s32 %s97, 1
      %p101 = scmp.eq.s32.totalorder %s21, 1
      %p102 = scmp.ne.s32.totalorder %s97, %s99
      %p103 = scmp.eq.s32.totalorder %s21, 0
      %p104 = por %p102, %p103
      %p105 = scmp.ne.s32.totalorder %s97, %s99
      %p106 = scmp.eq.s32.totalorder %s26, 1
      %p107 = por %p105, %p106
      %p108 = scmp.ne.s32.totalorder %s99, %s100
      %p109 = scmp.eq.s32.totalorder %s26, 0
      %p110 = por %p108, %p109
      %p111 = scmp.ne.s32.totalorder %s99, %s100
      %p112 = scmp.eq.s32.totalorder %s27, 1
      %p113 = por %p111, %p112
      %p115 = scmp.ne.s32.totalorder %s100, %s114
      %p116 = scmp.eq.s32.totalorder %s27, 0
      %p117 = por %p115, %p116
      %s119 = sadd.s32 %s118, 1
      %p122 = scmp.eq.s32.totalorder %s21, 1
      %p123 = scmp.ne.s32.totalorder %s118, %s120
      %p124 = scmp.eq.s32.totalorder %s21, 0
      %p125 = por %p123, %p124
      %p126 = scmp.ne.s32.totalorder %s118, %s120
      %p127 = scmp.eq.s32.totalorder %s26, 1
      %p128 = por %p126, %p127
      %p129 = scmp.ne.s32.totalorder %s120, %s121
      %p130 = scmp.eq.s32.totalorder %s26, 0
      %p131 = por %p129, %p130
      %p132 = scmp.ne.s32.totalorder %s120, %s121
      %p133 = scmp.eq.s32.totalorder %s27, 1
      %p134 = por %p132, %p133
      %p136 = scmp.ne.s32.totalorder %s121, %s135
      %p137 = scmp.eq.s32.totalorder %s27, 0
      %p138 = por %p136, %p137
      %s140 = sadd.s32 %s139, 1
      %p143 = scmp.eq.s32.totalorder %s21, 1
      %p144 = scmp.ne.s32.totalorder %s139, %s141
      %p145 = scmp.eq.s32.totalorder %s21, 0
      %p146 = por %p144, %p145
      %p147 = scmp.ne.s32.totalorder %s139, %s141
      %p148 = scmp.eq.s32.totalorder %s26, 1
      %p149 = por %p147, %p148
      %p150 = scmp.ne.s32.totalorder %s141, %s142
      %p151 = scmp.eq.s32.totalorder %s26, 0
      %p152 = por %p150, %p151
      %p153 = scmp.ne.s32.totalorder %s141, %s142
      %p154 = scmp.eq.s32.totalorder %s27, 1
      %p155 = por %p153, %p154
      %p157 = scmp.ne.s32.totalorder %s142, %s156
      %p158 = scmp.eq.s32.totalorder %s27, 0
      %p159 = por %p157, %p158
      %s161 = sadd.s32 %s160, 1
      %p164 = scmp.eq.s32.totalorder %s21, 1
      %p165 = scmp.ne.s32.totalorder %s160, %s162
      %p166 = scmp.eq.s32.totalorder %s21, 0
      %p167 = por %p165, %p166
      %p168 = scmp.ne.s32.totalorder %s160, %s162
      %p169 = scmp.eq.s32.totalorder %s26, 1
      %p170 = por %p168, %p169
      %p171 = scmp.ne.s32.totalorder %s162, %s163
      %p172 = scmp.eq.s32.totalorder %s26, 0
      %p173 = por %p171, %p172
      %p174 = scmp.ne.s32.totalorder %s162, %s163
      %p175 = scmp.eq.s32.totalorder %s27, 1
      %p176 = por %p174, %p175
      %p178 = scmp.ne.s32.totalorder %s163, %s177
      %p179 = scmp.eq.s32.totalorder %s27, 0
      %p180 = por %p178, %p179
      %s182 = sadd.s32 %s181, 1
      %p185 = scmp.eq.s32.totalorder %s21, 1
      %p186 = scmp.ne.s32.totalorder %s181, %s183
      %p187 = scmp.eq.s32.totalorder %s21, 0
      %p188 = por %p186, %p187
      %p189 = scmp.ne.s32.totalorder %s181, %s183
      %p190 = scmp.eq.s32.totalorder %s26, 1
      %p191 = por %p189, %p190
      %p192 = scmp.ne.s32.totalorder %s183, %s184
      %p193 = scmp.eq.s32.totalorder %s26, 0
      %p194 = por %p192, %p193
      %p195 = scmp.ne.s32.totalorder %s183, %s184
      %p196 = scmp.eq.s32.totalorder %s27, 1
      %p197 = por %p195, %p196
      %p199 = scmp.ne.s32.totalorder %s184, %s198
      %p200 = scmp.eq.s32.totalorder %s27, 0
      %p201 = por %p199, %p200
      %s203 = sadd.s32 %s202, 1
      %p206 = scmp.eq.s32.totalorder %s21, 1
      %p207 = scmp.ne.s32.totalorder %s202, %s204
      %p208 = scmp.eq.s32.totalorder %s21, 0
      %p209 = por %p207, %p208
      %p210 = scmp.ne.s32.totalorder %s202, %s204
      %p211 = scmp.eq.s32.totalorder %s26, 1
      %p212 = por %p210, %p211
      %p213 = scmp.ne.s32.totalorder %s204, %s205
      %p214 = scmp.eq.s32.totalorder %s26, 0
      %p215 = por %p213, %p214
      %p216 = scmp.ne.s32.totalorder %s204, %s205
      %p217 = scmp.eq.s32.totalorder %s27, 1
      %p218 = por %p216, %p217
      %p220 = scmp.ne.s32.totalorder %s205, %s219
      %p221 = scmp.eq.s32.totalorder %s27, 0
      %p222 = por %p220, %p221
      %s223 = ssub.s32 %s28, %s40
      %s224 = ssub.s32 %s29, %s36
      %s225 = sor.u32 %s223, %s224
      %p226 = scmp.eq.s32.totalorder %s225, 0
      %s228 = sadd.s32 %s227, 1
      %s229 = scalar_select %p226, %s227, %s228
      %p232 = pneg %p226
      %p233 = scmp.eq.s32.totalorder %s21, 1
      %p234 = por %p232, %p233
      %p235 = scmp.ne.s32.totalorder %s227, %s230
      %p236 = scmp.eq.s32.totalorder %s21, 0
      %p237 = por %p235, %p236
      %p238 = scmp.ne.s32.totalorder %s227, %s230
      %p239 = scmp.eq.s32.totalorder %s26, 1
      %p240 = por %p238, %p239
      %p241 = scmp.ne.s32.totalorder %s230, %s231
      %p242 = scmp.eq.s32.totalorder %s26, 0
      %p243 = por %p241, %p242
      %p244 = scmp.ne.s32.totalorder %s230, %s231
      %p245 = scmp.eq.s32.totalorder %s27, 1
      %p246 = por %p244, %p245
      %p248 = scmp.ne.s32.totalorder %s231, %s247
      %p249 = scmp.eq.s32.totalorder %s27, 0
      %p250 = por %p248, %p249
      %p251 = scmp.le.s32.totalorder 1, %s21
      %p252 = scmp.lt.s32.totalorder %s21, 3
      %p253 = pnand %p251, %p252
      %p254 = pneg %p253
      // Predicated region
      $region9: #{tpu_custom_call.1} parent=5 // pred_check
        _
      $region10: #{tpu_custom_call.1} parent=5 // pred_check_branch
        %256 = sbr.rel (%p253) target = $region12
      $region11: #{tpu_custom_call.1} parent=5 // pred_region
        %s257 = ssub.s32 %s21, 1
        // Predicated region
        $region13: #{tpu_custom_call.1} parent=11 // pred_check
          %p258 = pneg %p110
        $region14: #{tpu_custom_call.1} parent=11 // pred_check_branch
          %260 = sbr.rel (%p258) target = $region16
        $region15: #{tpu_custom_call.1} parent=11 // pred_region
          %s262 = ssub.s32 64, 64
          %263 = vsyncadd [#allocation6], %s262
          %s265 = sshll.u32 [#allocation5], 4
          %s266 = int_to_ptr.vmem [resolvable:$true] %s265
          %268 = dma.hbm_to_vmem [thread:$0]  %s2, 64, %s266, [#allocation6]
        $region16: #{tpu_custom_call.1} parent=11 // pred_fallthru
          _
        // Predicated region
        $region17: #{tpu_custom_call.1} parent=11 // pred_check
          %p269 = pneg %p131
        $region18: #{tpu_custom_call.1} parent=11 // pred_check_branch
          %271 = sbr.rel (%p269) target = $region20
        $region19: #{tpu_custom_call.1} parent=11 // pred_region
          _
        $region20: #{tpu_custom_call.1} parent=11 // pred_fallthru
          _
        // Predicated region
        $region21: #{tpu_custom_call.1} parent=11 // pred_check
          %p272 = pneg %p152
        $region22: #{tpu_custom_call.1} parent=11 // pred_check_branch
          %274 = sbr.rel (%p272) target = $region24
        $region23: #{tpu_custom_call.1} parent=11 // pred_region
          _
        $region24: #{tpu_custom_call.1} parent=11 // pred_fallthru
          _
        // Predicated region
        $region25: #{tpu_custom_call.1} parent=11 // pred_check
          %p275 = pneg %p173
        $region26: #{tpu_custom_call.1} parent=11 // pred_check_branch
          %277 = sbr.rel (%p275) target = $region28
        $region27: #{tpu_custom_call.1} parent=11 // pred_region
          _
        $region28: #{tpu_custom_call.1} parent=11 // pred_fallthru
          _
        // Predicated region
        $region29: #{tpu_custom_call.1} parent=11 // pred_check
          %p278 = pneg %p194
        $region30: #{tpu_custom_call.1} parent=11 // pred_check_branch
          %280 = sbr.rel (%p278) target = $region32
        $region31: #{tpu_custom_call.1} parent=11 // pred_region
          _
        $region32: #{tpu_custom_call.1} parent=11 // pred_fallthru
          _
        // Predicated region
        $region33: #{tpu_custom_call.1} parent=11 // pred_check
          %p281 = pneg %p215
        $region34: #{tpu_custom_call.1} parent=11 // pred_check_branch
          %283 = sbr.rel (%p281) target = $region36
        $region35: #{tpu_custom_call.1} parent=11 // pred_region
          _
        $region36: #{tpu_custom_call.1} parent=11 // pred_fallthru
          _
      $region12: #{tpu_custom_call.1} parent=5 // pred_fallthru
        _
      %p284 = scmp.lt.s32.totalorder %s21, 2
      // Predicated region
      $region37: #{tpu_custom_call.1} parent=5 // pred_check
        %p285 = pneg %p284
      $region38: #{tpu_custom_call.1} parent=5 // pred_check_branch
        %287 = sbr.rel (%p285) target = $region40
      $region39: #{tpu_custom_call.1} parent=5 // pred_region
        // Predicated region
        $region41: #{tpu_custom_call.1} parent=39 // pred_check
          %p288 = pneg %p55
        $region42: #{tpu_custom_call.1} parent=39 // pred_check_branch
          %290 = sbr.rel (%p288) target = $region44
        $region43: #{tpu_custom_call.1} parent=39 // pred_region
          %s291 = sand.u32 %s45, 1
          %s292 = scalar_lea.sflag [#allocation3], %s291
          %s293 = sand.u32 %s45, 1
          %s294 = smul.addr %s293, 8
          %s295 = scalar_lea.vmem [#allocation2], %s294
          %s296 = smul.u32 2, %s29
          %s298 = ssub.s32 128, 128
          %299 = vsyncadd %s292, %s298
          %s300 = smul.addr %s28, 2
          %s301 = sadd.s32 %s296, %s300
          %s302 = smul.addr %s301, 64
          %s303 = scalar_lea.hbm %s0, %s302
          %s305 = sshll.u32 %s295, 4
          %s306 = int_to_ptr.vmem [resolvable:$true] %s305
          %308 = dma.hbm_to_vmem [thread:$0]  %s303, 128, %s306, %s292
        $region44: #{tpu_custom_call.1} parent=39 // pred_fallthru
          _
        // Predicated region
        $region45: #{tpu_custom_call.1} parent=39 // pred_check
          %p309 = pneg %p83
        $region46: #{tpu_custom_call.1} parent=39 // pred_check_branch
          %311 = sbr.rel (%p309) target = $region48
        $region47: #{tpu_custom_call.1} parent=39 // pred_region
          %s312 = smul.u32 2, %s29
          %p313 = scmp.lt.s32.totalorder %s28, 1
          %s314 = scalar_select %p313, %s28, 1
          %p315 = scmp.lt.s32.totalorder %s312, 1
          %s316 = scalar_select %p315, %s312, 1
          %s317 = smul.addr %s314, 2
          %s318 = sadd.s32 %s316, %s317
          %s319 = smul.addr %s318, 4
          %s320 = scalar_lea.vmem %s1, %s319
          %s321 = smul.u32 2, %s29
        $region48: #{tpu_custom_call.1} parent=39 // pred_fallthru
          _
      $region40: #{tpu_custom_call.1} parent=5 // pred_fallthru
        _
      %p322 = scmp.le.s32.totalorder 1, %s21
      %p323 = scmp.lt.s32.totalorder %s21, 3
      %p324 = pnand %p322, %p323
      %p325 = pneg %p324
      // Predicated region
      $region49: #{tpu_custom_call.1} parent=5 // pred_check
        _
      $region50: #{tpu_custom_call.1} parent=5 // pred_check_branch
        %327 = sbr.rel (%p324) target = $region52
      $region51: #{tpu_custom_call.1} parent=5 // pred_region
        %s328 = ssub.s32 %s21, 1
        %s329 = sand.u32 %s48, 1
        %s330 = scalar_lea.sflag [#allocation3], %s329
        %s331 = sand.u32 %s48, 1
        %s332 = smul.addr %s331, 8
        %s333 = scalar_lea.vmem [#allocation2], %s332
        // Predicated region
        $region53: #{tpu_custom_call.1} parent=51 // pred_check
          %p334 = pneg %p61
        $region54: #{tpu_custom_call.1} parent=51 // pred_check_branch
          %336 = sbr.rel (%p334) target = $region56
        $region55: #{tpu_custom_call.1} parent=51 // pred_region
          %337 = dma.done %s330, 128
        $region56: #{tpu_custom_call.1} parent=51 // pred_fallthru
          _
        // Predicated region
        $region57: #{tpu_custom_call.1} parent=51 // pred_check
          %p338 = pneg %p110
        $region58: #{tpu_custom_call.1} parent=51 // pred_check_branch
          %340 = sbr.rel (%p338) target = $region60
        $region59: #{tpu_custom_call.1} parent=51 // pred_region
          %341 = dma.done [#allocation6], 64
        $region60: #{tpu_custom_call.1} parent=51 // pred_fallthru
          _
        %s342 = sand.u32 %s48, 1
        %s343 = scalar_lea.sflag [#allocation3], %s342
        %s344 = sand.u32 %s48, 1
        %s345 = smul.addr %s344, 8
        %s346 = scalar_lea.vmem [#allocation2], %s345
        %p347 = pneg %p61
        %p348 = pneg %p58
        %s349 = smul.u32 2, %s31
        %p350 = scmp.lt.s32.totalorder %s30, 1
        %s351 = scalar_select %p350, %s30, 1
        %p352 = scmp.lt.s32.totalorder %s349, 1
        %s353 = scalar_select %p352, %s349, 1
        %s354 = smul.addr %s351, 2
        %s355 = sadd.s32 %s353, %s354
        %s356 = smul.addr %s355, 4
        %s357 = scalar_lea.vmem %s1, %s356
        %p358 = pneg %p89
        %p359 = pneg %p86
        %p360 = pneg %p110
        %p361 = pneg %p107
        %p362 = pneg %p131
        %p363 = pneg %p128
        %p364 = pneg %p152
        %p365 = pneg %p149
        %p366 = pneg %p173
        %p367 = pneg %p170
        %p368 = pneg %p194
        %p369 = pneg %p191
        %p370 = pneg %p215
        %p371 = pneg %p212
        %p372 = pneg %p243
        %p373 = pneg %p240
        %s374 = sand.u32 %s230, 1
        %s375 = scalar_lea.sflag [#allocation4], %s374
        %s376 = sand.u32 %s230, 1
        %s377 = smul.addr %s376, 8
        %s378 = scalar_lea.vmem [#allocation7], %s377
        %s379 = smul.u32 2, %s31
        %s380 = smul.u32 2, %s31
        %p381 = scmp.lt.s32.totalorder %s30, 1
        %s382 = scalar_select %p381, %s30, 1
        %p383 = scmp.lt.s32.totalorder %s380, 1
        %s384 = scalar_select %p383, %s380, 1
        %s385 = smul.addr %s382, 2
        %s386 = sadd.s32 %s384, %s385
        %s387 = smul.addr %s386, 4
        %s388 = scalar_lea.vmem %s1, %s387
        %s389 = smul.u32 2, %s31
        %s390 = smul.u32 2, %s31
        %v391 = vld [vmem:[%s333] sm:$0xff]
        %v392 = vld [vmem:[%s388] sm:$0xff]
        %v393 = vld [vmem:[#allocation5] sm:$0xf]
        %395 = vset.pattern.permute.xlu0 0
        %396 = vperm.xlu0 %395, %v393
        %v397 = vpop.permute.xlu0 %396
        %v400 = vlaneseq
        %v401 = vshrl.u32 %v400, 7
        %v402 = vsub.s32 0, %v401
        %v403 = vrot.slane %v391, %v402
        %v404 = vlaneseq
        %v405 = vshrl.u32 %v404, 7
        %v406 = vsub.s32 4, %v405
        %v407 = vrot.slane %v391, %v406
        %v410 = vlaneseq
        %v411 = vshrl.u32 %v410, 7
        %v412 = vsub.s32 0, %v411
        %v413 = vrot.slane %v403, %v412
        %v414 = vlaneseq
        %v415 = vshrl.u32 %v414, 7
        %v416 = vsub.s32 0, %v415
        %v417 = vrot.slane %v407, %v416
        %v418 = vmul.f32 %v397, %v413
        %v419 = vmul.f32 %v397, %v417
        %420 = vset.pattern.permute.xlu0 1
        %421 = vperm.xlu0 %420, %v393
        %v422 = vpop.permute.xlu0 %421
        %v424 = vlaneseq
        %v425 = vshrl.u32 %v424, 7
        %v426 = vsub.s32 1, %v425
        %v427 = vrot.slane %v391, %v426
        %v428 = vlaneseq
        %v429 = vshrl.u32 %v428, 7
        %v430 = vsub.s32 5, %v429
        %v431 = vrot.slane %v391, %v430
        %v434 = vlaneseq
        %v435 = vshrl.u32 %v434, 7
        %v436 = vsub.s32 1, %v435
        %v437 = vrot.slane %v427, %v436
        %v438 = vlaneseq
        %v439 = vshrl.u32 %v438, 7
        %v440 = vsub.s32 1, %v439
        %v441 = vrot.slane %v431, %v440
        %v442 = vmul.f32 %v422, %v437
        %v443 = vmul.f32 %v422, %v441
        %v444 = vadd.f32 %v418, %v442
        %v445 = vadd.f32 %v419, %v443
        %446 = vset.pattern.permute.xlu0 2
        %447 = vperm.xlu0 %446, %v393
        %v448 = vpop.permute.xlu0 %447
        %v450 = vlaneseq
        %v451 = vshrl.u32 %v450, 7
        %v452 = vsub.s32 2, %v451
        %v453 = vrot.slane %v391, %v452
        %v454 = vlaneseq
        %v455 = vshrl.u32 %v454, 7
        %v456 = vsub.s32 6, %v455
        %v457 = vrot.slane %v391, %v456
        %v460 = vlaneseq
        %v461 = vshrl.u32 %v460, 7
        %v462 = vsub.s32 2, %v461
        %v463 = vrot.slane %v453, %v462
        %v464 = vlaneseq
        %v465 = vshrl.u32 %v464, 7
        %v466 = vsub.s32 2, %v465
        %v467 = vrot.slane %v457, %v466
        %v468 = vmul.f32 %v448, %v463
        %v469 = vmul.f32 %v448, %v467
        %v470 = vadd.f32 %v444, %v468
        %v471 = vadd.f32 %v445, %v469
        %472 = vset.pattern.permute.xlu0 3
        %473 = vperm.xlu0 %472, %v393
        %v474 = vpop.permute.xlu0 %473
        %v476 = vlaneseq
        %v477 = vshrl.u32 %v476, 7
        %v478 = vsub.s32 3, %v477
        %v479 = vrot.slane %v391, %v478
        %v480 = vlaneseq
        %v481 = vshrl.u32 %v480, 7
        %v482 = vsub.s32 7, %v481
        %v483 = vrot.slane %v391, %v482
        %v486 = vlaneseq
        %v487 = vshrl.u32 %v486, 7
        %v488 = vsub.s32 3, %v487
        %v489 = vrot.slane %v479, %v488
        %v490 = vlaneseq
        %v491 = vshrl.u32 %v490, 7
        %v492 = vsub.s32 3, %v491
        %v493 = vrot.slane %v483, %v492
        %v494 = vmul.f32 %v474, %v489
        %v495 = vmul.f32 %v474, %v493
        %v496 = vadd.f32 %v470, %v494
        %v497 = vadd.f32 %v471, %v495
        %v498 = vld [vmem:[%s3] sm:$0xf]
        %500 = vset.pattern.permute.xlu0 0
        %501 = vperm.xlu0 %500, %v498
        %v502 = vpop.permute.xlu0 %501
        %v504 = vadd.f32 %v496, %v502
        %v505 = vadd.f32 %v497, %v502
        %v506 = vmax.f32 %v504, 0.0
        %v507 = vmax.f32 %v505, 0.0
        %v508 = vld [vmem:[%s4] sm:$0xf]
        %510 = vset.pattern.permute.xlu0 0
        %511 = vperm.xlu0 %510, %v508
        %v512 = vpop.permute.xlu0 %511
        %v515 = vlaneseq
        %v516 = vshrl.u32 %v515, 7
        %v517 = vsub.s32 0, %v516
        %v518 = vrot.slane %v392, %v517
        %v519 = vlaneseq
        %v520 = vshrl.u32 %v519, 7
        %v521 = vsub.s32 4, %v520
        %v522 = vrot.slane %v392, %v521
        %v525 = vlaneseq
        %v526 = vshrl.u32 %v525, 7
        %v527 = vsub.s32 0, %v526
        %v528 = vrot.slane %v518, %v527
        %v529 = vlaneseq
        %v530 = vshrl.u32 %v529, 7
        %v531 = vsub.s32 0, %v530
        %v532 = vrot.slane %v522, %v531
        %v533 = vmul.f32 %v512, %v528
        %v534 = vmul.f32 %v512, %v532
        %535 = vset.pattern.permute.xlu0 1
        %536 = vperm.xlu0 %535, %v508
        %v537 = vpop.permute.xlu0 %536
        %v539 = vlaneseq
        %v540 = vshrl.u32 %v539, 7
        %v541 = vsub.s32 1, %v540
        %v542 = vrot.slane %v392, %v541
        %v543 = vlaneseq
        %v544 = vshrl.u32 %v543, 7
        %v545 = vsub.s32 5, %v544
        %v546 = vrot.slane %v392, %v545
        %v549 = vlaneseq
        %v550 = vshrl.u32 %v549, 7
        %v551 = vsub.s32 1, %v550
        %v552 = vrot.slane %v542, %v551
        %v553 = vlaneseq
        %v554 = vshrl.u32 %v553, 7
        %v555 = vsub.s32 1, %v554
        %v556 = vrot.slane %v546, %v555
        %v557 = vmul.f32 %v537, %v552
        %v558 = vmul.f32 %v537, %v556
        %v559 = vadd.f32 %v533, %v557
        %v560 = vadd.f32 %v534, %v558
        %561 = vset.pattern.permute.xlu0 2
        %562 = vperm.xlu0 %561, %v508
        %v563 = vpop.permute.xlu0 %562
        %v565 = vlaneseq
        %v566 = vshrl.u32 %v565, 7
        %v567 = vsub.s32 2, %v566
        %v568 = vrot.slane %v392, %v567
        %v569 = vlaneseq
        %v570 = vshrl.u32 %v569, 7
        %v571 = vsub.s32 6, %v570
        %v572 = vrot.slane %v392, %v571
        %v575 = vlaneseq
        %v576 = vshrl.u32 %v575, 7
        %v577 = vsub.s32 2, %v576
        %v578 = vrot.slane %v568, %v577
        %v579 = vlaneseq
        %v580 = vshrl.u32 %v579, 7
        %v581 = vsub.s32 2, %v580
        %v582 = vrot.slane %v572, %v581
        %v583 = vmul.f32 %v563, %v578
        %v584 = vmul.f32 %v563, %v582
        %v585 = vadd.f32 %v559, %v583
        %v586 = vadd.f32 %v560, %v584
        %587 = vset.pattern.permute.xlu0 3
        %588 = vperm.xlu0 %587, %v508
        %v589 = vpop.permute.xlu0 %588
        %v591 = vlaneseq
        %v592 = vshrl.u32 %v591, 7
        %v593 = vsub.s32 3, %v592
        %v594 = vrot.slane %v392, %v593
        %v595 = vlaneseq
        %v596 = vshrl.u32 %v595, 7
        %v597 = vsub.s32 7, %v596
        %v598 = vrot.slane %v392, %v597
        %v601 = vlaneseq
        %v602 = vshrl.u32 %v601, 7
        %v603 = vsub.s32 3, %v602
        %v604 = vrot.slane %v594, %v603
        %v605 = vlaneseq
        %v606 = vshrl.u32 %v605, 7
        %v607 = vsub.s32 3, %v606
        %v608 = vrot.slane %v598, %v607
        %v609 = vmul.f32 %v589, %v604
        %v610 = vmul.f32 %v589, %v608
        %v611 = vadd.f32 %v585, %v609
        %v612 = vadd.f32 %v586, %v610
        %v613 = vld [vmem:[%s5] sm:$0xf]
        %615 = vset.pattern.permute.xlu0 0
        %616 = vperm.xlu0 %615, %v613
        %v617 = vpop.permute.xlu0 %616
        %v619 = vadd.f32 %v611, %v617
        %v620 = vadd.f32 %v612, %v617
        %v621 = vmax.f32 %v619, 0.0
        %v622 = vmax.f32 %v620, 0.0
        %v623 = vadd.f32 %v506, %v621
        %v624 = vadd.f32 %v507, %v622
        %v625 = vsub.f32 0.0, %v623
        %v626 = vsub.f32 0.0, %v624
        %v627 = vmul.f32 %v625, 1.442695
        %v628 = vpow.pop %v627
        %v629 = vmul.f32 %v626, 1.442695
        %v630 = vpow.pop %v629
        %v631 = vadd.f32 %v628, 1.0
        %v632 = vadd.f32 %v630, 1.0
        %v633 = vrcp.pop %v631
        %v634 = vrcp.pop %v632
        %v635 = vsub.f32 %v506, %v621
        %v636 = vsub.f32 %v507, %v622
        %v637 = vmul.f32 %v633, %v635
        %v638 = vmul.f32 %v634, %v636
        %v639 = vadd.f32 %v621, %v637
        %v640 = vadd.f32 %v622, %v638
        %v641 = vld [vmem:[%s6] sm:$0xf]
        %v642 = vld [vmem:[%s7] sm:$0xf]
        %644 = vset.pattern.permute.xlu0 0
        %645 = vperm.xlu0 %644, %v641
        %v646 = vpop.permute.xlu0 %645
        %v648 = vlaneseq
        %v649 = vshrl.u32 %v648, 7
        %v650 = vsub.s32 0, %v649
        %v651 = vrot.slane %v639, %v650
        %v652 = vlaneseq
        %v653 = vshrl.u32 %v652, 7
        %v654 = vsub.s32 0, %v653
        %v655 = vrot.slane %v640, %v654
        %v656 = vmul.f32 %v646, %v651
        %v657 = vmul.f32 %v646, %v655
        %658 = vset.pattern.permute.xlu0 1
        %659 = vperm.xlu0 %658, %v641
        %v660 = vpop.permute.xlu0 %659
        %v662 = vlaneseq
        %v663 = vshrl.u32 %v662, 7
        %v664 = vsub.s32 1, %v663
        %v665 = vrot.slane %v639, %v664
        %v666 = vlaneseq
        %v667 = vshrl.u32 %v666, 7
        %v668 = vsub.s32 1, %v667
        %v669 = vrot.slane %v640, %v668
        %v670 = vmul.f32 %v660, %v665
        %v671 = vmul.f32 %v660, %v669
        %v672 = vadd.f32 %v656, %v670
        %v673 = vadd.f32 %v657, %v671
        %674 = vset.pattern.permute.xlu0 2
        %675 = vperm.xlu0 %674, %v641
        %v676 = vpop.permute.xlu0 %675
        %v678 = vlaneseq
        %v679 = vshrl.u32 %v678, 7
        %v680 = vsub.s32 2, %v679
        %v681 = vrot.slane %v639, %v680
        %v682 = vlaneseq
        %v683 = vshrl.u32 %v682, 7
        %v684 = vsub.s32 2, %v683
        %v685 = vrot.slane %v640, %v684
        %v686 = vmul.f32 %v676, %v681
        %v687 = vmul.f32 %v676, %v685
        %v688 = vadd.f32 %v672, %v686
        %v689 = vadd.f32 %v673, %v687
        %690 = vset.pattern.permute.xlu0 3
        %691 = vperm.xlu0 %690, %v641
        %v692 = vpop.permute.xlu0 %691
        %v694 = vlaneseq
        %v695 = vshrl.u32 %v694, 7
        %v696 = vsub.s32 3, %v695
        %v697 = vrot.slane %v639, %v696
        %v698 = vlaneseq
        %v699 = vshrl.u32 %v698, 7
        %v700 = vsub.s32 3, %v699
        %v701 = vrot.slane %v640, %v700
        %v702 = vmul.f32 %v692, %v697
        %v703 = vmul.f32 %v692, %v701
        %v704 = vadd.f32 %v688, %v702
        %v705 = vadd.f32 %v689, %v703
        %707 = vset.pattern.permute.xlu0 0
        %708 = vperm.xlu0 %707, %v642
        %v709 = vpop.permute.xlu0 %708
        %v711 = vadd.f32 %v704, %v709
        %v712 = vadd.f32 %v705, %v709
        %v713 = vmax.f32 %v711, 0.0
        %v714 = vmax.f32 %v712, 0.0
        %v715 = vlaneseq
        %v716 = vshrl.u32 %v715, 7
        %v717 = vsub.s32 0, %v716
        %v718 = vrot.slane %v713, %v717
        %v719 = vlaneseq
        %v720 = vshrl.u32 %v719, 7
        %v721 = vsub.s32 0, %v720
        %v722 = vrot.slane %v714, %v721
        %v723 = vmul.f32 %v646, %v718
        %v724 = vmul.f32 %v646, %v722
        %v725 = vlaneseq
        %v726 = vshrl.u32 %v725, 7
        %v727 = vsub.s32 1, %v726
        %v728 = vrot.slane %v713, %v727
        %v729 = vlaneseq
        %v730 = vshrl.u32 %v729, 7
        %v731 = vsub.s32 1, %v730
        %v732 = vrot.slane %v714, %v731
        %v733 = vmul.f32 %v660, %v728
        %v734 = vmul.f32 %v660, %v732
        %v735 = vadd.f32 %v723, %v733
        %v736 = vadd.f32 %v724, %v734
        %v737 = vlaneseq
        %v738 = vshrl.u32 %v737, 7
        %v739 = vsub.s32 2, %v738
        %v740 = vrot.slane %v713, %v739
        %v741 = vlaneseq
        %v742 = vshrl.u32 %v741, 7
        %v743 = vsub.s32 2, %v742
        %v744 = vrot.slane %v714, %v743
        %v745 = vmul.f32 %v676, %v740
        %v746 = vmul.f32 %v676, %v744
        %v747 = vadd.f32 %v735, %v745
        %v748 = vadd.f32 %v736, %v746
        %v749 = vlaneseq
        %v750 = vshrl.u32 %v749, 7
        %v751 = vsub.s32 3, %v750
        %v752 = vrot.slane %v713, %v751
        %v753 = vlaneseq
        %v754 = vshrl.u32 %v753, 7
        %v755 = vsub.s32 3, %v754
        %v756 = vrot.slane %v714, %v755
        %v757 = vmul.f32 %v692, %v752
        %v758 = vmul.f32 %v692, %v756
        %v759 = vadd.f32 %v747, %v757
        %v760 = vadd.f32 %v748, %v758
        %v761 = vadd.f32 %v759, %v709
        %v762 = vadd.f32 %v760, %v709
        %v763 = vmax.f32 %v761, 0.0
        %v764 = vmax.f32 %v762, 0.0
        %v767 = vcombine.low %v763, %v764
        %769 = vst [vmem:[%s378] sm:$0xff] %v767
        %s770 = sand.u32 %s230, 1
        %s771 = scalar_lea.sflag [#allocation4], %s770
        %s772 = sand.u32 %s230, 1
        %s773 = smul.addr %s772, 8
        %s774 = scalar_lea.vmem [#allocation7], %s773
        // Predicated region
        $region61: #{tpu_custom_call.1} parent=51 // pred_check
          %p775 = pneg %p240
        $region62: #{tpu_custom_call.1} parent=51 // pred_check_branch
          %777 = sbr.rel (%p775) target = $region64
        $region63: #{tpu_custom_call.1} parent=51 // pred_region
          %s778 = smul.u32 2, %s31
          %s780 = ssub.s32 128, 128
          %781 = vsyncadd %s771, %s780
          %s782 = smul.addr %s30, 2
          %s783 = sadd.s32 %s778, %s782
          %s784 = smul.addr %s783, 64
          %s785 = scalar_lea.hbm %s8, %s784
          %s787 = sshll.u32 %s774, 4
          %s788 = int_to_ptr.vmem [resolvable:$true] %s787
          %790 = dma.vmem_to_hbm [thread:$0]  %s788, 128, %s785, %s771
        $region64: #{tpu_custom_call.1} parent=51 // pred_fallthru
          _
      $region52: #{tpu_custom_call.1} parent=5 // pred_fallthru
        _
      %p791 = scmp.le.s32.totalorder 2, %s21
      // Predicated region
      $region65: #{tpu_custom_call.1} parent=5 // pred_check
        %p792 = pneg %p791
      $region66: #{tpu_custom_call.1} parent=5 // pred_check_branch
        %794 = sbr.rel (%p792) target = $region68
      $region67: #{tpu_custom_call.1} parent=5 // pred_region
        %s795 = ssub.s32 %s21, 2
        // Predicated region
        $region69: #{tpu_custom_call.1} parent=67 // pred_check
          %p796 = pneg %p246
        $region70: #{tpu_custom_call.1} parent=67 // pred_check_branch
          %798 = sbr.rel (%p796) target = $region72
        $region71: #{tpu_custom_call.1} parent=67 // pred_region
          %s799 = sand.u32 %s231, 1
          %s800 = scalar_lea.sflag [#allocation4], %s799
          %s801 = sand.u32 %s231, 1
          %s802 = smul.addr %s801, 8
          %s803 = scalar_lea.vmem [#allocation7], %s802
          %804 = dma.done %s800, 128
        $region72: #{tpu_custom_call.1} parent=67 // pred_fallthru
          _
      $region68: #{tpu_custom_call.1} parent=5 // pred_fallthru
        _
    $region6: #{tpu_custom_call.1} parent=1 // loop_footer
      %s25 = sadd.s32 1, %s21
    $region7: #{tpu_custom_call.1} parent=1 // loop_footer_branch
      %20 = sbr.rel target = $region3
    $region8: #{tpu_custom_call.1} parent=1 // loop_exit
      _
    %805 = vsyncpa [#allocation3], 1
    %s806 = scalar_lea.sflag [#allocation3], 1
    %807 = vsyncpa %s806, 1
    %808 = vsyncpa [#allocation6], 1
    %809 = vsyncpa [#allocation4], 1
    %s810 = scalar_lea.sflag [#allocation4], 1
    %811 = vsyncpa %s810, 1

</llo_original>
